<compile_context>
chip_gen: v6e
topology: v6e:2x2x1
jax: 0.10.0
libtpu: 0.0.40
codegen_flags: <defaults>
</compile_context>

<pallas_src>
import functools
import math

import jax
import jax.numpy as jnp
from jax.experimental import pallas as pl
from jax.experimental.pallas import tpu as pltpu


# ---------------------------------------------------------------------------
# Pallas kernels
# ---------------------------------------------------------------------------

def _round_up(x, m):
    return (x + m - 1) // m * m


def _matmul_affine_kernel(x_ref, w_ref, s_ref, b_ref, *rest, relu, has_res):
    if has_res:
        r_ref, o_ref, acc_ref = rest
    else:
        r_ref = None
        o_ref, acc_ref = rest

    k = pl.program_id(2)

    @pl.when(k == 0)
    def _():
        acc_ref[...] = jnp.zeros_like(acc_ref)

    acc_ref[...] += jnp.dot(x_ref[...], w_ref[...],
                            preferred_element_type=jnp.float32)

    @pl.when(k == pl.num_programs(2) - 1)
    def _():
        out = acc_ref[...] * s_ref[...] + b_ref[...]
        if has_res:
            out = out + r_ref[...].astype(jnp.float32)
        if relu:
            out = jnp.maximum(out, 0.0)
        o_ref[...] = out.astype(o_ref.dtype)


def _pick_tn(N):
    if N <= 128:
        return N                      # full-dim lane block, no N padding
    if N % 512 == 0 and N >= 1024:
        return 512                    # wide MXU feed, >=2 j-blocks for megacore
    if N % 256 == 0:
        return 256
    if N % 128 == 0:
        return 128
    return N


def matmul_affine(x, w, scale, bias, relu=False, residual=None,
                  out_dtype=jnp.bfloat16):
    """act((x @ w) * scale + bias [+ residual]); bf16 operands, fp32 accumulate."""
    M, K = x.shape
    K2, N = w.shape
    assert K == K2 and scale.shape == (1, N) and bias.shape == (1, N)

    tn = _pick_tn(N)
    tk = K if K <= 8192 else 512      # all shapes in this model take the K branch
    Kp = _round_up(K, tk)
    tm = 128 if M >= 128 else _round_up(M, 16)
    Mp = _round_up(M, tm)

    x = x.astype(jnp.bfloat16)
    if (Mp, Kp) != (M, K):
        x = jnp.pad(x, ((0, Mp - M), (0, Kp - K)))
    w = w.astype(jnp.bfloat16)
    if Kp != K:
        w = jnp.pad(w, ((0, Kp - K), (0, 0)))

    args = [x, w, scale, bias]
    in_specs = [
        pl.BlockSpec((tm, tk), lambda i, j, k: (i, k)),
        pl.BlockSpec((tk, tn), lambda i, j, k: (k, j)),
        pl.BlockSpec((1, tn), lambda i, j, k: (0, j)),
        pl.BlockSpec((1, tn), lambda i, j, k: (0, j)),
    ]
    has_res = residual is not None
    if has_res:
        r = residual.astype(jnp.bfloat16)
        if Mp != M:
            r = jnp.pad(r, ((0, Mp - M), (0, 0)))
        args.append(r)
        in_specs.append(pl.BlockSpec((tm, tn), lambda i, j, k: (i, j)))

    out = pl.pallas_call(
        functools.partial(_matmul_affine_kernel, relu=relu, has_res=has_res),
        out_shape=jax.ShapeDtypeStruct((Mp, N), out_dtype),
        grid_spec=pltpu.PrefetchScalarGridSpec(
            num_scalar_prefetch=0,
            grid=(Mp // tm, N // tn, Kp // tk),
            in_specs=in_specs,
            out_specs=pl.BlockSpec((tm, tn), lambda i, j, k: (i, j)),
            scratch_shapes=[pltpu.VMEM((tm, tn), jnp.float32)],
        ),
        compiler_params=pltpu.CompilerParams(
            dimension_semantics=("parallel", "parallel", "arbitrary")),
    )(*args)
    return out[:M] if Mp != M else out


def _pool_kernel(x_ref, mean_ref, max_ref, gem_ref):
    x = x_ref[...].astype(jnp.float32)               # (B, HW, C), C on lanes
    mean_ref[...] = jnp.mean(x, axis=1)              # SPoC
    max_ref[...] = jnp.max(x, axis=1)                # MAC
    c = jnp.mean(x * x * x, axis=1)                  # GeM p=3 (VPU, no pow loop)
    gem_ref[...] = jnp.sign(c) * jnp.abs(c) ** (1.0 / 3.0)


def fused_global_pool(shared_nhwc):
    """Read the (B, H, W, 2048) feature map once; produce all three descriptors."""
    B, H, W, C = shared_nhwc.shape
    x = shared_nhwc.reshape(B, H * W, C)
    mean, mx, gem = pl.pallas_call(
        _pool_kernel,
        out_shape=tuple(jax.ShapeDtypeStruct((B, C), jnp.float32) for _ in range(3)),
        grid=(1,),
        in_specs=[pl.BlockSpec((B, H * W, C), lambda i: (0, 0, 0))],
        out_specs=tuple(pl.BlockSpec((B, C), lambda i: (0, 0)) for _ in range(3)),
    )(x)
    return {'S': mean, 'M': mx, 'G': gem}


def _l2norm_kernel(x_ref, o_ref):
    x = x_ref[...].astype(jnp.float32)
    n = jnp.sqrt(jnp.sum(x * x, axis=-1, keepdims=True))
    o_ref[...] = x / jnp.maximum(n, 1e-12)           # matches F.normalize eps


def l2_normalize(x):
    return pl.pallas_call(
        _l2norm_kernel,
        out_shape=jax.ShapeDtypeStruct(x.shape, jnp.float32),
        grid=(1,),
        in_specs=[pl.BlockSpec(x.shape, lambda i: (0,) * x.ndim)],
        out_specs=pl.BlockSpec(x.shape, lambda i: (0,) * x.ndim),
    )(x)


# ---------------------------------------------------------------------------
# Plain-JAX glue: NHWC im2col, maxpool (single stem op)
# ---------------------------------------------------------------------------

def im2col_nhwc(x, k, stride, pad):
    B, H, W, C = x.shape
    xp = jnp.pad(x, ((0, 0), (pad, pad), (pad, pad), (0, 0)))
    Ho = (H + 2 * pad - k) // stride + 1
    Wo = (W + 2 * pad - k) // stride + 1
    cols = [xp[:, dy:dy + stride * Ho:stride, dx:dx + stride * Wo:stride, :]
            for dy in range(k) for dx in range(k)]
    patches = jnp.concatenate(cols, axis=-1)          # (B, Ho, Wo, k*k*C)
    return patches.reshape(B * Ho * Wo, k * k * C), Ho, Wo


def maxpool_3x3_s2_p1(x):                             # NHWC
    B, H, W, C = x.shape
    xp = jnp.pad(x, ((0, 0), (1, 1), (1, 1), (0, 0)), constant_values=-jnp.inf)
    Ho = (H + 2 - 3) // 2 + 1
    Wo = (W + 2 - 3) // 2 + 1
    out = None
    for dy in range(3):
        for dx in range(3):
            s = xp[:, dy:dy + 2 * Ho:2, dx:dx + 2 * Wo:2, :]
            out = s if out is None else jnp.maximum(out, s)
    return out


# ---------------------------------------------------------------------------
# Parameter construction (all weight prep hoisted to init)
# ---------------------------------------------------------------------------

class KeyGen:
    def __init__(self, key):
        self.key = key
        self.i = 0

    def __call__(self):
        self.i += 1
        return jax.random.fold_in(self.key, self.i)


def init_conv(kg, cin, cout, k):
    fan_out = cout * k * k                            # kaiming_normal_, fan_out
    std = math.sqrt(2.0 / fan_out)
    return std * jax.random.normal(kg(), (cout, cin, k, k), jnp.float32)


def init_bn(kg, c):
    return {
        'gamma': 1.0 + 0.1 * jax.random.normal(kg(), (c,), jnp.float32),
        'beta': 0.1 * jax.random.normal(kg(), (c,), jnp.float32),
        'mean': 0.05 * jax.random.normal(kg(), (c,), jnp.float32),
        'var': 1.0 + 0.1 * jax.random.uniform(kg(), (c,), jnp.float32),
    }


def bn_fold(bn, eps=1e-5):
    scale = bn['gamma'] / jnp.sqrt(bn['var'] + eps)
    return scale, bn['beta'] - bn['mean'] * scale


def make_conv_bn(kg, cin, cout, k, stride, pad):
    """Conv weight + folded BN, pre-reshaped to (K, N) bf16 for the matmul."""
    w = init_conv(kg, cin, cout, k)                   # (cout, cin, k, k)
    scale, bias = bn_fold(init_bn(kg, cout))
    wk = jnp.transpose(w, (2, 3, 1, 0)).reshape(k * k * cin, cout)
    return {'w': wk.astype(jnp.bfloat16),
            's': scale.reshape(1, cout).astype(jnp.float32),
            'b': bias.reshape(1, cout).astype(jnp.float32),
            'k': k, 'stride': stride, 'pad': pad}


def init_bottleneck(kg, inplanes, planes, stride, downsample):
    width = planes                                    # groups=1, base_width=64
    p = {
        'conv1': make_conv_bn(kg, inplanes, width, 1, 1, 0),
        'conv2': make_conv_bn(kg, width, width, 3, stride, 1),
        'conv3': make_conv_bn(kg, width, planes * 4, 1, 1, 0),
    }
    if downsample:
        p['down'] = make_conv_bn(kg, inplanes, planes * 4, 1, stride, 0)
    return p


def init_resnet50_features(kg):
    # resnet50: Bottleneck, layers=[3, 4, 6, 3]; layer3 stride=1 (per the given spec)
    params = {'stem': make_conv_bn(kg, 3, 64, 7, 2, 3)}
    layers_cfg = [(64, 3, 1), (128, 4, 2), (256, 6, 1), (512, 3, 2)]
    inplanes = 64
    layers = []
    for planes, nblocks, stride in layers_cfg:
        blocks = []
        downsample = (stride != 1) or (inplanes != planes * 4)
        blocks.append(init_bottleneck(kg, inplanes, planes, stride, downsample))
        inplanes = planes * 4
        for _ in range(1, nblocks):
            blocks.append(init_bottleneck(kg, inplanes, planes, 1, False))
        layers.append(blocks)
    params['layers'] = layers
    return params


def init_model(kg, gd_config, feature_dim, num_classes):
    n = len(gd_config)
    assert feature_dim % n == 0
    k = feature_dim // n
    p_list = tuple(1 if c == 'S' else (float('inf') if c == 'M' else 3)
                   for c in gd_config)

    main_w = []
    for _ in range(n):
        w = (1.0 / math.sqrt(2048)) * jax.random.normal(kg(), (k, 2048), jnp.float32)
        main_w.append(jnp.transpose(w).astype(jnp.bfloat16))          # (2048, k)

    # auxiliary module: BatchNorm1d (folded, inference) + Linear(2048, num_classes)
    aux_bn = init_bn(kg, 2048)
    aux_w = (1.0 / math.sqrt(2048)) * jax.random.normal(kg(), (num_classes, 2048),
                                                        jnp.float32)
    aux_b = (1.0 / math.sqrt(2048)) * jax.random.normal(kg(), (num_classes,),
                                                        jnp.float32)
    s_bn, b_bn = bn_fold(aux_bn)
    aux_w_eff = (s_bn[:, None] * aux_w.T).astype(jnp.bfloat16)        # (2048, ncls)
    aux_b_eff = (aux_b + b_bn @ aux_w.T).reshape(1, -1).astype(jnp.float32)

    params = {
        'backbone': init_resnet50_features(kg),
        'main_w': main_w,
        'main_s': jnp.ones((1, k), jnp.float32),
        'main_b': jnp.zeros((1, k), jnp.float32),
        'aux_w': aux_w_eff,
        'aux_s': jnp.ones((1, num_classes), jnp.float32),
        'aux_b': aux_b_eff,
    }
    return params, p_list


# ---------------------------------------------------------------------------
# Forward pass (NHWC everywhere)
# ---------------------------------------------------------------------------

def conv_bn(x, cp, relu, residual=None):
    """x: (B, H, W, Cin) bf16  ->  (B, Ho, Wo, Cout) bf16 with fused BN/res/ReLU."""
    B = x.shape[0]
    k, stride = cp['k'], cp['stride']
    if k == 1:
        if stride > 1:
            x = x[:, ::stride, ::stride, :]
        Ho, Wo, Cin = x.shape[1], x.shape[2], x.shape[3]
        patches = x.reshape(B * Ho * Wo, Cin)
    else:
        patches, Ho, Wo = im2col_nhwc(x, k, stride, cp['pad'])
    r = None if residual is None else residual.reshape(patches.shape[0], -1)
    y = matmul_affine(patches, cp['w'], cp['s'], cp['b'], relu=relu, residual=r)
    return y.reshape(B, Ho, Wo, -1)


def bottleneck_forward(x, p):
    out = conv_bn(x, p['conv1'], relu=True)
    out = conv_bn(out, p['conv2'], relu=True)
    if 'down' in p:
        identity = conv_bn(x, p['down'], relu=False)
    else:
        identity = x
    # conv3: BN + residual add + ReLU all fused into the matmul epilogue
    return conv_bn(out, p['conv3'], relu=True, residual=identity)


def features_forward(x, params):
    x = conv_bn(x, params['stem'], relu=True)
    x = maxpool_3x3_s2_p1(x)
    for blocks in params['layers']:
        for p in blocks:
            x = bottleneck_forward(x, p)
    return x


def model_forward(x_nchw, params, p_list):
    # single layout change for the whole network
    x = jnp.transpose(x_nchw, (0, 2, 3, 1)).astype(jnp.bfloat16)      # NHWC bf16
    shared = features_forward(x, params['backbone'])                  # (B, h, w, 2048)
    pooled = fused_global_pool(shared)                                # one read of shared

    gds = []
    classes = None
    for i, p in enumerate(p_list):
        key = 'S' if p == 1 else ('M' if p == float('inf') else 'G')
        gd = pooled[key]                                              # (B, 2048) f32
        if i == 0:
            classes = matmul_affine(gd, params['aux_w'], params['aux_s'],
                                    params['aux_b'], relu=False,
                                    out_dtype=jnp.float32)
        proj = matmul_affine(gd, params['main_w'][i], params['main_s'],
                             params['main_b'], relu=False,
                             out_dtype=jnp.float32)
        gds.append(l2_normalize(proj))

    descriptors = l2_normalize(jnp.concatenate(gds, axis=-1))
    return descriptors, classes


if __name__ == "__main__":
    key = jax.random.PRNGKey(0)
    kg = KeyGen(key)

    gd_config, feature_dim, num_classes = 'SMG', 192, 10
    params, p_list = init_model(kg, gd_config, feature_dim, num_classes)

    x = jax.random.normal(jax.random.fold_in(key, 9999), (2, 3, 64, 64), jnp.float32)

    descriptors, classes = model_forward(x, params, p_list)
    jax.block_until_ready((descriptors, classes))

    assert descriptors.shape == (2, feature_dim), descriptors.shape
    assert classes.shape == (2, num_classes), classes.shape
    assert bool(jnp.all(jnp.isfinite(descriptors))) and bool(jnp.all(jnp.isfinite(classes)))
    print("KERNEL_OK")
</pallas_src>

<mosaic_0001>
module attributes {stable_mosaic.version = 11 : i64} {
  func.func @_matmul_affine_kernel(%arg0: i32, %arg1: i32, %arg2: i32, %arg3: memref<128x147xbf16, #tpu.memory_space<vmem>>, %arg4: memref<147x64xbf16, #tpu.memory_space<vmem>>, %arg5: memref<1x64xf32, #tpu.memory_space<vmem>>, %arg6: memref<1x64xf32, #tpu.memory_space<vmem>>, %arg7: memref<128x64xbf16, #tpu.memory_space<vmem>>, %arg8: memref<128x64xf32, #tpu.memory_space<vmem>>) attributes {dimension_semantics = [#tpu.dimension_semantics<parallel>, #tpu.dimension_semantics<parallel>, #tpu.dimension_semantics<arbitrary>], iteration_bounds = array<i64: 16, 1, 1>, scalar_prefetch = 0 : i64, scratch_operands = 1 : i64, tpu.core_type = #tpu.core_type<tc>, window_params = [{transform_indices = @transform_0, window_bounds = array<i64: 128, 147>}, {transform_indices = @transform_1, window_bounds = array<i64: 147, 64>}, {transform_indices = @transform_2, window_bounds = array<i64: 1, 64>}, {transform_indices = @transform_3, window_bounds = array<i64: 1, 64>}, {transform_indices = @transform_4, window_bounds = array<i64: 128, 64>}]} {
    %c0_i32 = arith.constant 0 : i32
    %0 = arith.cmpi eq, %arg2, %c0_i32 : i32
    %1 = arith.extui %0 : i1 to i32
    %c0_i32_0 = arith.constant 0 : i32
    %2 = arith.cmpi ne, %1, %c0_i32_0 : i32
    scf.if %2 {
      %cst_10 = arith.constant 0.000000e+00 : f32
      %12 = vector.broadcast %cst_10 : f32 to vector<128x64xf32>
      %c0_11 = arith.constant 0 : index
      %c0_12 = arith.constant 0 : index
      %13 = vector.load %arg8[%c0_11, %c0_12] : memref<128x64xf32, #tpu.memory_space<vmem>>, vector<128x64xf32>
      tpu.vector_store %arg8[%c0_11, %c0_12], %12 {strides = array<i32>} : memref<128x64xf32, #tpu.memory_space<vmem>>, vector<128x64xf32>,
    } else {
    }
    %c0 = arith.constant 0 : index
    %c0_1 = arith.constant 0 : index
    %3 = vector.load %arg8[%c0, %c0_1] : memref<128x64xf32, #tpu.memory_space<vmem>>, vector<128x64xf32>
    %c0_2 = arith.constant 0 : index
    %c0_3 = arith.constant 0 : index
    %4 = vector.load %arg3[%c0_2, %c0_3] : memref<128x147xbf16, #tpu.memory_space<vmem>>, vector<128x147xbf16>
    %c0_4 = arith.constant 0 : index
    %c0_5 = arith.constant 0 : index
    %5 = vector.load %arg4[%c0_4, %c0_5] : memref<147x64xbf16, #tpu.memory_space<vmem>>, vector<147x64xbf16>
    %cst = arith.constant dense<0.000000e+00> : vector<128x64xf32>
    %6 = tpu.matmul %4, %5, %cst {dimension_numbers = #tpu.dot_dimension_numbers<[1], [0], [0], [1], [0, 0, 1, 1], [], []>} : vector<128x147xbf16>, vector<147x64xbf16>, vector<128x64xf32> -> vector<128x64xf32>
    %7 = arith.addf %3, %6 : vector<128x64xf32>
    %c0_6 = arith.constant 0 : index
    %c0_7 = arith.constant 0 : index
    %8 = vector.load %arg8[%c0_6, %c0_7] : memref<128x64xf32, #tpu.memory_space<vmem>>, vector<128x64xf32>
    tpu.vector_store %arg8[%c0_6, %c0_7], %7 {strides = array<i32>} : memref<128x64xf32, #tpu.memory_space<vmem>>, vector<128x64xf32>,
    %c0_i32_8 = arith.constant 0 : i32
    %9 = arith.cmpi eq, %arg2, %c0_i32_8 : i32
    %10 = arith.extui %9 : i1 to i32
    %c0_i32_9 = arith.constant 0 : i32
    %11 = arith.cmpi ne, %10, %c0_i32_9 : i32
    scf.if %11 {
      %c0_10 = arith.constant 0 : index
      %c0_11 = arith.constant 0 : index
      %12 = vector.load %arg8[%c0_10, %c0_11] : memref<128x64xf32, #tpu.memory_space<vmem>>, vector<128x64xf32>
      %c0_12 = arith.constant 0 : index
      %c0_13 = arith.constant 0 : index
      %13 = vector.load %arg5[%c0_12, %c0_13] : memref<1x64xf32, #tpu.memory_space<vmem>>, vector<1x64xf32>
      %14 = vector.broadcast %13 : vector<1x64xf32> to vector<128x64xf32>
      %15 = arith.mulf %12, %14 : vector<128x64xf32>
      %c0_14 = arith.constant 0 : index
      %c0_15 = arith.constant 0 : index
      %16 = vector.load %arg6[%c0_14, %c0_15] : memref<1x64xf32, #tpu.memory_space<vmem>>, vector<1x64xf32>
      %17 = vector.broadcast %16 : vector<1x64xf32> to vector<128x64xf32>
      %18 = arith.addf %15, %17 : vector<128x64xf32>
      %cst_16 = arith.constant 0.000000e+00 : f32
      %19 = vector.broadcast %cst_16 : f32 to vector<128x64xf32>
      %20 = arith.maximumf %18, %19 : vector<128x64xf32>
      %21 = arith.truncf %20 : vector<128x64xf32> to vector<128x64xbf16>
      %c0_17 = arith.constant 0 : index
      %c0_18 = arith.constant 0 : index
      %22 = vector.load %arg7[%c0_17, %c0_18] : memref<128x64xbf16, #tpu.memory_space<vmem>>, vector<128x64xbf16>
      tpu.vector_store %arg7[%c0_17, %c0_18], %21 {strides = array<i32>} : memref<128x64xbf16, #tpu.memory_space<vmem>>, vector<128x64xbf16>,
    } else {
    }
    return
  }
  func.func @transform_0(%arg0: i32, %arg1: i32, %arg2: i32) -> (i32, i32) {
    %c0_i32 = arith.constant 0 : i32
    return %arg0, %arg2 : i32, i32
  }
  func.func @transform_1(%arg0: i32, %arg1: i32, %arg2: i32) -> (i32, i32) {
    %c0_i32 = arith.constant 0 : i32
    return %arg2, %arg1 : i32, i32
  }
  func.func @transform_2(%arg0: i32, %arg1: i32, %arg2: i32) -> (i32, i32) {
    %c0_i32 = arith.constant 0 : i32
    %c0_i32_0 = arith.constant 0 : i32
    return %c0_i32, %arg1 : i32, i32
  }
  func.func @transform_3(%arg0: i32, %arg1: i32, %arg2: i32) -> (i32, i32) {
    %c0_i32 = arith.constant 0 : i32
    %c0_i32_0 = arith.constant 0 : i32
    return %c0_i32, %arg1 : i32, i32
  }
  func.func @transform_4(%arg0: i32, %arg1: i32, %arg2: i32) -> (i32, i32) {
    %c0_i32 = arith.constant 0 : i32
    return %arg0, %arg1 : i32, i32
  }
}

</mosaic_0001>

<llo_original>
// kernel: tpu_custom_call.1
$region0: #{tpu_custom_call.1}
  #allocation0 [shape = 'u32[]', space=smem, size = 0x4, offset = 0x4, fixed_abs, tag = 'smem constant byte address 0x4 - core index']
  #allocation1 [shape = 'u32[144,128]{1,0:T(1,128)}', space=vmem, size = 0x12000, scoped, tag = 'internal scratch']
  #allocation2 [shape = 'f32[128,64]{1,0:T(8,128)}', space=vmem, size = 0x10000, scoped, tag = 'scratch operand']
  %s0 = inlined_call_operand.vmem [shape: bf16[2048,147], index: 0, kind: input, shape index: {}]
  %s1 = inlined_call_operand.vmem [shape: bf16[147,64], index: 1, kind: input, shape index: {}]
  %s2 = inlined_call_operand.vmem [shape: f32[1,64], index: 2, kind: input, shape index: {}]
  %s3 = inlined_call_operand.vmem [shape: f32[1,64], index: 3, kind: input, shape index: {}]
  %s4 = inlined_call_operand.vmem [shape: bf16[2048,64], index: 4, kind: output, shape index: {}]
  %s5 = sld [smem:[#allocation0]]
  $region57: #{tpu_custom_call.1} parent=0
    _
  %s7 = ssub.s32 1, %s5
  %s8 = scalar_select 0, %s7, %s5
  loop: start=0, step=1, limit=18
  $region2: #{tpu_custom_call.1} parent=0 // loop_pre_header
    _
  $region3: #{tpu_custom_call.1} parent=0 // loop_header
    %s10 = sphi 0, %s14
    %p11 = scmp.ge.s32.totalorder %s10, 18
    %s17 = sphi 0, %s36
    %s18 = sphi 0, %s32
    %s19 = sphi 0, %s28
    %s20 = sphi 0, %s17
    %s21 = sphi 0, %s18
    %s22 = sphi 0, %s19
    %s23 = sphi 0, %s20
    %s24 = sphi 0, %s21
    %s25 = sphi 0, %s22
    %s41 = sphi 0, %s43
    %s44 = sphi 0, %s41
    %s45 = sphi 0, %s44
    %s61 = sphi 0, %s45
    %s69 = sphi 0, %s71
    %s72 = sphi 0, %s69
    %s73 = sphi 0, %s72
    %s89 = sphi 0, %s73
    %s95 = sphi 0, %s97
    %s98 = sphi 0, %s95
    %s99 = sphi 0, %s98
    %s115 = sphi 0, %s99
    %s121 = sphi 0, %s123
    %s124 = sphi 0, %s121
    %s125 = sphi 0, %s124
    %s141 = sphi 0, %s125
    %s149 = sphi 0, %s151
    %s152 = sphi 0, %s149
    %s153 = sphi 0, %s152
    %s169 = sphi 0, %s153
  $region4: #{tpu_custom_call.1} parent=0 // loop_header_branch
    %13 = sbr.rel (%p11) target = $region8
  $region5: #{tpu_custom_call.1} parent=0 // loop_body
    %s15 = ssub.s32 %s10, 1
    %s16 = ssub.s32 %s10, 2
    %s26 = sadd.s32 1, %s19
    %p27 = scmp.ge.s32.totalorder %s26, 1
    %s28 = scalar_select %p27, 0, %s26
    %s29 = sadd.s32 1, %s18
    %s30 = scalar_select %p27, %s29, %s18
    %p31 = scmp.ge.s32.totalorder %s30, 1
    %s32 = scalar_select %p31, 0, %s30
    %s33 = sadd.s32 1, %s17
    %s34 = scalar_select %p31, %s33, %s17
    %p35 = scmp.ge.s32.totalorder %s34, 16
    %s36 = scalar_select %p35, 0, %s34
    %s37 = ssub.s32 %s17, %s36
    %s38 = ssub.s32 %s19, %s28
    %s39 = sor.u32 %s37, %s38
    %p40 = scmp.eq.s32.totalorder %s39, 0
    %s42 = sadd.s32 %s41, 1
    %s43 = scalar_select %p40, %s41, %s42
    %p46 = pneg %p40
    %p47 = scmp.eq.s32.totalorder %s10, 15
    %p48 = por %p46, %p47
    %p49 = scmp.ne.s32.totalorder %s41, %s44
    %p50 = scmp.eq.s32.totalorder %s10, 0
    %p51 = por %p49, %p50
    %p52 = scmp.ne.s32.totalorder %s41, %s44
    %p53 = scmp.eq.s32.totalorder %s15, 15
    %p54 = por %p52, %p53
    %p55 = scmp.ne.s32.totalorder %s44, %s45
    %p56 = scmp.eq.s32.totalorder %s15, 0
    %p57 = por %p55, %p56
    %p58 = scmp.ne.s32.totalorder %s44, %s45
    %p59 = scmp.eq.s32.totalorder %s16, 15
    %p60 = por %p58, %p59
    %p62 = scmp.ne.s32.totalorder %s45, %s61
    %p63 = scmp.eq.s32.totalorder %s16, 0
    %p64 = por %p62, %p63
    %s65 = ssub.s32 %s19, %s28
    %s66 = ssub.s32 %s18, %s32
    %s67 = sor.u32 %s65, %s66
    %p68 = scmp.eq.s32.totalorder %s67, 0
    %s70 = sadd.s32 %s69, 1
    %s71 = scalar_select %p68, %s69, %s70
    %p74 = pneg %p68
    %p75 = scmp.eq.s32.totalorder %s10, 15
    %p76 = por %p74, %p75
    %p77 = scmp.ne.s32.totalorder %s69, %s72
    %p78 = scmp.eq.s32.totalorder %s10, 0
    %p79 = por %p77, %p78
    %p80 = scmp.ne.s32.totalorder %s69, %s72
    %p81 = scmp.eq.s32.totalorder %s15, 15
    %p82 = por %p80, %p81
    %p83 = scmp.ne.s32.totalorder %s72, %s73
    %p84 = scmp.eq.s32.totalorder %s15, 0
    %p85 = por %p83, %p84
    %p86 = scmp.ne.s32.totalorder %s72, %s73
    %p87 = scmp.eq.s32.totalorder %s16, 15
    %p88 = por %p86, %p87
    %p90 = scmp.ne.s32.totalorder %s73, %s89
    %p91 = scmp.eq.s32.totalorder %s16, 0
    %p92 = por %p90, %p91
    %s93 = ssub.s32 %s18, %s32
    %p94 = scmp.eq.s32.totalorder %s93, 0
    %s96 = sadd.s32 %s95, 1
    %s97 = scalar_select %p94, %s95, %s96
    %p100 = pneg %p94
    %p101 = scmp.eq.s32.totalorder %s10, 15
    %p102 = por %p100, %p101
    %p103 = scmp.ne.s32.totalorder %s95, %s98
    %p104 = scmp.eq.s32.totalorder %s10, 0
    %p105 = por %p103, %p104
    %p106 = scmp.ne.s32.totalorder %s95, %s98
    %p107 = scmp.eq.s32.totalorder %s15, 15
    %p108 = por %p106, %p107
    %p109 = scmp.ne.s32.totalorder %s98, %s99
    %p110 = scmp.eq.s32.totalorder %s15, 0
    %p111 = por %p109, %p110
    %p112 = scmp.ne.s32.totalorder %s98, %s99
    %p113 = scmp.eq.s32.totalorder %s16, 15
    %p114 = por %p112, %p113
    %p116 = scmp.ne.s32.totalorder %s99, %s115
    %p117 = scmp.eq.s32.totalorder %s16, 0
    %p118 = por %p116, %p117
    %s119 = ssub.s32 %s18, %s32
    %p120 = scmp.eq.s32.totalorder %s119, 0
    %s122 = sadd.s32 %s121, 1
    %s123 = scalar_select %p120, %s121, %s122
    %p126 = pneg %p120
    %p127 = scmp.eq.s32.totalorder %s10, 15
    %p128 = por %p126, %p127
    %p129 = scmp.ne.s32.totalorder %s121, %s124
    %p130 = scmp.eq.s32.totalorder %s10, 0
    %p131 = por %p129, %p130
    %p132 = scmp.ne.s32.totalorder %s121, %s124
    %p133 = scmp.eq.s32.totalorder %s15, 15
    %p134 = por %p132, %p133
    %p135 = scmp.ne.s32.totalorder %s124, %s125
    %p136 = scmp.eq.s32.totalorder %s15, 0
    %p137 = por %p135, %p136
    %p138 = scmp.ne.s32.totalorder %s124, %s125
    %p139 = scmp.eq.s32.totalorder %s16, 15
    %p140 = por %p138, %p139
    %p142 = scmp.ne.s32.totalorder %s125, %s141
    %p143 = scmp.eq.s32.totalorder %s16, 0
    %p144 = por %p142, %p143
    %s145 = ssub.s32 %s17, %s36
    %s146 = ssub.s32 %s18, %s32
    %s147 = sor.u32 %s145, %s146
    %p148 = scmp.eq.s32.totalorder %s147, 0
    %s150 = sadd.s32 %s149, 1
    %s151 = scalar_select %p148, %s149, %s150
    %p154 = pneg %p148
    %p155 = scmp.eq.s32.totalorder %s10, 15
    %p156 = por %p154, %p155
    %p157 = scmp.ne.s32.totalorder %s149, %s152
    %p158 = scmp.eq.s32.totalorder %s10, 0
    %p159 = por %p157, %p158
    %p160 = scmp.ne.s32.totalorder %s149, %s152
    %p161 = scmp.eq.s32.totalorder %s15, 15
    %p162 = por %p160, %p161
    %p163 = scmp.ne.s32.totalorder %s152, %s153
    %p164 = scmp.eq.s32.totalorder %s15, 0
    %p165 = por %p163, %p164
    %p166 = scmp.ne.s32.totalorder %s152, %s153
    %p167 = scmp.eq.s32.totalorder %s16, 15
    %p168 = por %p166, %p167
    %p170 = scmp.ne.s32.totalorder %s153, %s169
    %p171 = scmp.eq.s32.totalorder %s16, 0
    %p172 = por %p170, %p171
    %p173 = scmp.le.s32.totalorder 1, %s10
    %p174 = scmp.lt.s32.totalorder %s10, 17
    %p175 = pnand %p173, %p174
    %p176 = pneg %p175
    // Predicated region
    $region9: #{tpu_custom_call.1} parent=5 // pred_check
      _
    $region10: #{tpu_custom_call.1} parent=5 // pred_check_branch
      %178 = sbr.rel (%p175) target = $region12
    $region11: #{tpu_custom_call.1} parent=5 // pred_region
      %s179 = ssub.s32 %s10, 1
      // Predicated region
      $region13: #{tpu_custom_call.1} parent=11 // pred_check
        %p180 = pneg %p85
      $region14: #{tpu_custom_call.1} parent=11 // pred_check_branch
        %182 = sbr.rel (%p180) target = $region16
      $region15: #{tpu_custom_call.1} parent=11 // pred_region
        %s183 = smul.u32 19, %s22
        %p184 = scmp.lt.s32.totalorder %s183, 18
        %s185 = scalar_select %p184, %s183, 18
        %p186 = scmp.lt.s32.totalorder %s21, 0
        %s187 = scalar_select %p186, %s21, 0
        %s188 = sadd.s32 %s187, %s185
        %s189 = smul.addr %s188, 4
        %s190 = scalar_lea.vmem %s1, %s189
        %s191 = smul.u32 19, %s22
      $region16: #{tpu_custom_call.1} parent=11 // pred_fallthru
        _
      // Predicated region
      $region17: #{tpu_custom_call.1} parent=11 // pred_check
        %p192 = pneg %p111
      $region18: #{tpu_custom_call.1} parent=11 // pred_check_branch
        %194 = sbr.rel (%p192) target = $region20
      $region19: #{tpu_custom_call.1} parent=11 // pred_region
        %p195 = scmp.lt.s32.totalorder %s21, 0
        %s196 = scalar_select %p195, %s21, 0
        %s197 = scalar_lea.vmem %s2, %s196
      $region20: #{tpu_custom_call.1} parent=11 // pred_fallthru
        _
      // Predicated region
      $region21: #{tpu_custom_call.1} parent=11 // pred_check
        %p198 = pneg %p137
      $region22: #{tpu_custom_call.1} parent=11 // pred_check_branch
        %200 = sbr.rel (%p198) target = $region24
      $region23: #{tpu_custom_call.1} parent=11 // pred_region
        %p201 = scmp.lt.s32.totalorder %s21, 0
        %s202 = scalar_select %p201, %s21, 0
        %s203 = scalar_lea.vmem %s3, %s202
      $region24: #{tpu_custom_call.1} parent=11 // pred_fallthru
        _
    $region12: #{tpu_custom_call.1} parent=5 // pred_fallthru
      _
    %p204 = scmp.lt.s32.totalorder %s10, 16
    // Predicated region
    $region25: #{tpu_custom_call.1} parent=5 // pred_check
      %p205 = pneg %p204
    $region26: #{tpu_custom_call.1} parent=5 // pred_check_branch
      %207 = sbr.rel (%p205) target = $region28
    $region27: #{tpu_custom_call.1} parent=5 // pred_region
      // Predicated region
      $region29: #{tpu_custom_call.1} parent=27 // pred_check
        %p208 = pneg %p51
      $region30: #{tpu_custom_call.1} parent=27 // pred_check_branch
        %210 = sbr.rel (%p208) target = $region32
      $region31: #{tpu_custom_call.1} parent=27 // pred_region
        %s211 = smul.u32 16, %s17
        %s212 = smul.u32 2, %s19
        %p213 = scmp.lt.s32.totalorder %s211, 255
        %s214 = scalar_select %p213, %s211, 255
        %p215 = scmp.lt.s32.totalorder %s212, 1
        %s216 = scalar_select %p215, %s212, 1
        %s217 = smul.addr %s214, 2
        %s218 = sadd.s32 %s216, %s217
        %s219 = smul.addr %s218, 4
        %s220 = scalar_lea.vmem %s0, %s219
        %s221 = smul.u32 16, %s17
        %s222 = smul.u32 2, %s19
      $region32: #{tpu_custom_call.1} parent=27 // pred_fallthru
        _
    $region28: #{tpu_custom_call.1} parent=5 // pred_fallthru
      _
    %p223 = scmp.le.s32.totalorder 1, %s10
    %p224 = scmp.lt.s32.totalorder %s10, 17
    %p225 = pnand %p223, %p224
    %p226 = pneg %p225
    // Predicated region
    $region33: #{tpu_custom_call.1} parent=5 // pred_check
      _
    $region34: #{tpu_custom_call.1} parent=5 // pred_check_branch
      %228 = sbr.rel (%p225) target = $region36
    $region35: #{tpu_custom_call.1} parent=5 // pred_region
      %s229 = ssub.s32 %s10, 1
      %s230 = smul.u32 16, %s20
      %s231 = smul.u32 2, %s22
      %p232 = scmp.lt.s32.totalorder %s230, 255
      %s233 = scalar_select %p232, %s230, 255
      %p234 = scmp.lt.s32.totalorder %s231, 1
      %s235 = scalar_select %p234, %s231, 1
      %s236 = smul.addr %s233, 2
      %s237 = sadd.s32 %s235, %s236
      %s238 = smul.addr %s237, 4
      %s239 = scalar_lea.vmem %s0, %s238
      %p240 = pneg %p57
      %p241 = pneg %p54
      %s242 = smul.u32 19, %s22
      %p243 = scmp.lt.s32.totalorder %s242, 18
      %s244 = scalar_select %p243, %s242, 18
      %p245 = scmp.lt.s32.totalorder %s21, 0
      %s246 = scalar_select %p245, %s21, 0
      %s247 = sadd.s32 %s246, %s244
      %s248 = smul.addr %s247, 4
      %s249 = scalar_lea.vmem %s1, %s248
      %p250 = pneg %p85
      %p251 = pneg %p82
      %p252 = scmp.lt.s32.totalorder %s21, 0
      %s253 = scalar_select %p252, %s21, 0
      %s254 = scalar_lea.vmem %s2, %s253
      %p255 = pneg %p111
      %p256 = pneg %p108
      %p257 = scmp.lt.s32.totalorder %s21, 0
      %s258 = scalar_select %p257, %s21, 0
      %s259 = scalar_lea.vmem %s3, %s258
      %p260 = pneg %p137
      %p261 = pneg %p134
      %p262 = pneg %p165
      %p263 = pneg %p162
      %s264 = smul.u32 16, %s20
      %p265 = scmp.lt.s32.totalorder %s264, 255
      %s266 = scalar_select %p265, %s264, 255
      %p267 = scmp.lt.s32.totalorder %s21, 0
      %s268 = scalar_select %p267, %s21, 0
      %s269 = sadd.s32 %s268, %s266
      %s270 = smul.addr %s269, 4
      %s271 = scalar_lea.vmem %s4, %s270
      %s272 = smul.u32 16, %s20
      %s273 = smul.u32 2, %s22
      %p274 = scmp.lt.s32.totalorder %s272, 255
      %s275 = scalar_select %p274, %s272, 255
      %p276 = scmp.lt.s32.totalorder %s273, 1
      %s277 = scalar_select %p276, %s273, 1
      %s278 = smul.addr %s275, 2
      %s279 = sadd.s32 %s277, %s278
      %s280 = smul.addr %s279, 4
      %s281 = scalar_lea.vmem %s0, %s280
      %s282 = smul.u32 16, %s20
      %s283 = smul.u32 2, %s22
      %s284 = smul.u32 19, %s22
      %p285 = scmp.lt.s32.totalorder %s284, 18
      %s286 = scalar_select %p285, %s284, 18
      %p287 = scmp.lt.s32.totalorder %s21, 0
      %s288 = scalar_select %p287, %s21, 0
      %s289 = sadd.s32 %s288, %s286
      %s290 = smul.addr %s289, 4
      %s291 = scalar_lea.vmem %s1, %s290
      %s292 = smul.u32 19, %s22
      %p293 = scmp.lt.s32.totalorder %s21, 0
      %s294 = scalar_select %p293, %s21, 0
      %s295 = scalar_lea.vmem %s2, %s294
      %p296 = scmp.lt.s32.totalorder %s21, 0
      %s297 = scalar_select %p296, %s21, 0
      %s298 = scalar_lea.vmem %s3, %s297
      %s299 = smul.u32 16, %s20
      %p300 = scmp.lt.s32.totalorder %s299, 255
      %s301 = scalar_select %p300, %s299, 255
      %p302 = scmp.lt.s32.totalorder %s21, 0
      %s303 = scalar_select %p302, %s21, 0
      %s304 = sadd.s32 %s303, %s301
      %s305 = smul.addr %s304, 4
      %s306 = scalar_lea.vmem %s4, %s305
      %s307 = smul.u32 16, %s20
      %p309 = scmp.eq.s32.totalorder %s22, 0
      // Predicated region
      $region37: #{tpu_custom_call.1} parent=35 // pred_check
        %p310 = pneg %p309
      $region38: #{tpu_custom_call.1} parent=35 // pred_check_branch
        %312 = sbr.rel (%p310) target = $region40
      $region39: #{tpu_custom_call.1} parent=35 // pred_region
        %vm313 = vcmask 523264
        %314 = vst.msk [vmem:[#allocation2] sm:$0xff] %vm313, 0.0
        %315 = vst.msk [vmem:[#allocation2 + $0x8] sm:$0xff] %vm313, 0.0
        %316 = vst.msk [vmem:[#allocation2 + $0x10] sm:$0xff] %vm313, 0.0
        %317 = vst.msk [vmem:[#allocation2 + $0x18] sm:$0xff] %vm313, 0.0
        %318 = vst.msk [vmem:[#allocation2 + $0x20] sm:$0xff] %vm313, 0.0
        %319 = vst.msk [vmem:[#allocation2 + $0x28] sm:$0xff] %vm313, 0.0
        %320 = vst.msk [vmem:[#allocation2 + $0x30] sm:$0xff] %vm313, 0.0
        %321 = vst.msk [vmem:[#allocation2 + $0x38] sm:$0xff] %vm313, 0.0
        %322 = vst.msk [vmem:[#allocation2 + $0x40] sm:$0xff] %vm313, 0.0
        %323 = vst.msk [vmem:[#allocation2 + $0x48] sm:$0xff] %vm313, 0.0
        %324 = vst.msk [vmem:[#allocation2 + $0x50] sm:$0xff] %vm313, 0.0
        %325 = vst.msk [vmem:[#allocation2 + $0x58] sm:$0xff] %vm313, 0.0
        %326 = vst.msk [vmem:[#allocation2 + $0x60] sm:$0xff] %vm313, 0.0
        %327 = vst.msk [vmem:[#allocation2 + $0x68] sm:$0xff] %vm313, 0.0
        %328 = vst.msk [vmem:[#allocation2 + $0x70] sm:$0xff] %vm313, 0.0
        %329 = vst.msk [vmem:[#allocation2 + $0x78] sm:$0xff] %vm313, 0.0
      $region40: #{tpu_custom_call.1} parent=35 // pred_fallthru
        _
      %v330 = vld [vmem:[#allocation2] sm:$0xff]
      %v331 = vld [vmem:[#allocation2 + $0x8] sm:$0xff]
      %v332 = vld [vmem:[#allocation2 + $0x10] sm:$0xff]
      %v333 = vld [vmem:[#allocation2 + $0x18] sm:$0xff]
      %v334 = vld [vmem:[#allocation2 + $0x20] sm:$0xff]
      %v335 = vld [vmem:[#allocation2 + $0x28] sm:$0xff]
      %v336 = vld [vmem:[#allocation2 + $0x30] sm:$0xff]
      %v337 = vld [vmem:[#allocation2 + $0x38] sm:$0xff]
      %v338 = vld [vmem:[#allocation2 + $0x40] sm:$0xff]
      %v339 = vld [vmem:[#allocation2 + $0x48] sm:$0xff]
      %v340 = vld [vmem:[#allocation2 + $0x50] sm:$0xff]
      %v341 = vld [vmem:[#allocation2 + $0x58] sm:$0xff]
      %v342 = vld [vmem:[#allocation2 + $0x60] sm:$0xff]
      %v343 = vld [vmem:[#allocation2 + $0x68] sm:$0xff]
      %v344 = vld [vmem:[#allocation2 + $0x70] sm:$0xff]
      %v345 = vld [vmem:[#allocation2 + $0x78] sm:$0xff]
      %v346 = vld [vmem:[%s281] sm:$0xff]
      %v347 = vld [vmem:[%s281 + $0x8] sm:$0xff]
      %v348 = vld [vmem:[%s281 + $0x10] sm:$0xff]
      %v349 = vld [vmem:[%s281 + $0x18] sm:$0xff]
      %v350 = vld [vmem:[%s281 + $0x20] sm:$0xff]
      %v351 = vld [vmem:[%s281 + $0x28] sm:$0xff]
      %v352 = vld [vmem:[%s281 + $0x30] sm:$0xff]
      %v353 = vld [vmem:[%s281 + $0x38] sm:$0xff]
      %v354 = vld [vmem:[%s281 + $0x40] sm:$0xff]
      %v355 = vld [vmem:[%s281 + $0x48] sm:$0xff]
      %v356 = vld [vmem:[%s281 + $0x50] sm:$0xff]
      %v357 = vld [vmem:[%s281 + $0x58] sm:$0xff]
      %v358 = vld [vmem:[%s281 + $0x60] sm:$0xff]
      %v359 = vld [vmem:[%s281 + $0x68] sm:$0xff]
      %v360 = vld [vmem:[%s281 + $0x70] sm:$0xff]
      %v361 = vld [vmem:[%s281 + $0x78] sm:$0xff]
      %v362 = vld [vmem:[%s291] sm:$0xf]
      %v363 = vld [vmem:[%s291 + $0x4] sm:$0xf]
      %v364 = vld [vmem:[%s291 + $0x8] sm:$0xf]
      %v365 = vld [vmem:[%s291 + $0xc] sm:$0xf]
      %v366 = vld [vmem:[%s291 + $0x10] sm:$0xf]
      %v367 = vld [vmem:[%s291 + $0x14] sm:$0xf]
      %v368 = vld [vmem:[%s291 + $0x18] sm:$0xf]
      %v369 = vld [vmem:[%s291 + $0x1c] sm:$0xf]
      %v370 = vld [vmem:[%s291 + $0x20] sm:$0xf]
      %v371 = vld [vmem:[%s291 + $0x24] sm:$0xf]
      %v372 = vld [vmem:[%s291 + $0x28] sm:$0xf]
      %v373 = vld [vmem:[%s291 + $0x2c] sm:$0xf]
      %v374 = vld [vmem:[%s291 + $0x30] sm:$0xf]
      %v375 = vld [vmem:[%s291 + $0x34] sm:$0xf]
      %v376 = vld [vmem:[%s291 + $0x38] sm:$0xf]
      %v377 = vld [vmem:[%s291 + $0x3c] sm:$0xf]
      %v378 = vld [vmem:[%s291 + $0x40] sm:$0xf]
      %v379 = vld [vmem:[%s291 + $0x44] sm:$0xf]
      %v380 = vld [vmem:[%s291 + $0x48] sm:$0x3]
      %v397 = vunpack.c.l.b16 %v346
      %v398 = vunpack.c.h.b16 %v346
      %v399 = vunpack.c.l.b16 %v347
      %v400 = vunpack.c.h.b16 %v347
      %v401 = vunpack.c.l.b16 %v348
      %v402 = vunpack.c.h.b16 %v348
      %v403 = vunpack.c.l.b16 %v349
      %v404 = vunpack.c.h.b16 %v349
      %v405 = vunpack.c.l.b16 %v350
      %v406 = vunpack.c.h.b16 %v350
      %v407 = vunpack.c.l.b16 %v351
      %v408 = vunpack.c.h.b16 %v351
      %v409 = vunpack.c.l.b16 %v352
      %v410 = vunpack.c.h.b16 %v352
      %v411 = vunpack.c.l.b16 %v353
      %v412 = vunpack.c.h.b16 %v353
      %v413 = vunpack.c.l.b16 %v354
      %v414 = vunpack.c.h.b16 %v354
      %v415 = vunpack.c.l.b16 %v355
      %v416 = vunpack.c.h.b16 %v355
      %v417 = vunpack.c.l.b16 %v356
      %v418 = vunpack.c.h.b16 %v356
      %v419 = vunpack.c.l.b16 %v357
      %v420 = vunpack.c.h.b16 %v357
      %v421 = vunpack.c.l.b16 %v358
      %v422 = vunpack.c.h.b16 %v358
      %v423 = vunpack.c.l.b16 %v359
      %v424 = vunpack.c.h.b16 %v359
      %v425 = vunpack.c.l.b16 %v360
      %v426 = vunpack.c.h.b16 %v360
      %v427 = vunpack.c.l.b16 %v361
      %v428 = vunpack.c.h.b16 %v361
      %v429 = vpack.c.b16 %v399, %v397
      %v430 = vpack.c.b16 %v400, %v398
      %v431 = vpack.c.b16 %v403, %v401
      %v432 = vpack.c.b16 %v404, %v402
      %v433 = vpack.c.b16 %v407, %v405
      %v434 = vpack.c.b16 %v408, %v406
      %v435 = vpack.c.b16 %v411, %v409
      %v436 = vpack.c.b16 %v412, %v410
      %v437 = vpack.c.b16 %v415, %v413
      %v438 = vpack.c.b16 %v416, %v414
      %v439 = vpack.c.b16 %v419, %v417
      %v440 = vpack.c.b16 %v420, %v418
      %v441 = vpack.c.b16 %v423, %v421
      %v442 = vpack.c.b16 %v424, %v422
      %v443 = vpack.c.b16 %v427, %v425
      %v444 = vpack.c.b16 %v428, %v426
      %v472 = vunpack.c.l.b16 %v362
      %v473 = vunpack.c.l.b16 %v363
      %v474 = vunpack.c.l.b16 %v364
      %v475 = vunpack.c.l.b16 %v365
      %v476 = vunpack.c.l.b16 %v366
      %v477 = vunpack.c.l.b16 %v367
      %v478 = vunpack.c.l.b16 %v368
      %v479 = vunpack.c.l.b16 %v369
      %v480 = vunpack.c.l.b16 %v370
      %v481 = vunpack.c.l.b16 %v371
      %v482 = vunpack.c.l.b16 %v372
      %v483 = vunpack.c.l.b16 %v373
      %v484 = vunpack.c.l.b16 %v374
      %v485 = vunpack.c.l.b16 %v375
      %v486 = vunpack.c.l.b16 %v376
      %v487 = vunpack.c.l.b16 %v377
      %v488 = vunpack.c.l.b16 %v378
      %v489 = vunpack.c.l.b16 %v379
      %v490 = vunpack.c.l.b16 %v380
      %v491 = vpack.c.b16 %v473, %v472
      %v492 = vpack.c.b16 %v475, %v474
      %v493 = vpack.c.b16 %v477, %v476
      %v494 = vpack.c.b16 %v479, %v478
      %v495 = vpack.c.b16 %v481, %v480
      %v496 = vpack.c.b16 %v483, %v482
      %v497 = vpack.c.b16 %v485, %v484
      %v498 = vpack.c.b16 %v487, %v486
      %v499 = vpack.c.b16 %v489, %v488
      %v500 = vpack.c.b16 %v490, %v490
      %vm510 = vcmask 154624
      %v512 = vsel %vm510, %v430, 0
      %v515 = vsel %vm510, %v432, 0
      %v518 = vsel %vm510, %v434, 0
      %v521 = vsel %vm510, %v436, 0
      %v524 = vsel %vm510, %v438, 0
      %v527 = vsel %vm510, %v440, 0
      %v530 = vsel %vm510, %v442, 0
      %v533 = vsel %vm510, %v444, 0
      %vm535 = vcmask 1040384
      %vm536 = vcmask 1041408
      %v537 = vsel %vm535, 4294967295, 65535
      %v538 = vsel %vm536, %v537, 0
      %v540 = vand.u32 %v500, %v538
      %542 = vmatprep.subr.bf16.mxu0 0
      %543 = vmatpush1.bf16.msra.mxu0 %v498
      %544 = vmatprep.subr.bf16.mxu0 0
      %545 = vmatpush1.bf16.msra.mxu0 %v497
      %546 = vmatprep.subr.bf16.mxu0 0
      %547 = vmatpush1.bf16.msra.mxu0 %v496
      %548 = vmatprep.subr.bf16.mxu0 0
      %549 = vmatpush1.bf16.msra.mxu0 %v495
      %550 = vmatprep.subr.bf16.mxu0 0
      %551 = vmatpush1.bf16.msra.mxu0 %v494
      %552 = vmatprep.subr.bf16.mxu0 0
      %553 = vmatpush1.bf16.msra.mxu0 %v493
      %554 = vmatprep.subr.bf16.mxu0 0
      %555 = vmatpush1.bf16.msra.mxu0 %v492
      %556 = vmatprep.subr.bf16.mxu0 0
      %557 = vmatpush1.bf16.msra.mxu0 %v491
      %558 = vmatprep.subr.bf16.mxu0 0
      %559 = vmatpush2.bf16.msra.mxu0 0
      %560 = vmatprep.subr.bf16.mxu0 0
      %561 = vmatpush2.bf16.msra.mxu0 0
      %562 = vmatprep.subr.bf16.mxu0 0
      %563 = vmatpush2.bf16.msra.mxu0 0
      %564 = vmatprep.subr.bf16.mxu0 0
      %565 = vmatpush2.bf16.msra.mxu0 0
      %566 = vmatprep.subr.bf16.mxu0 0
      %567 = vmatpush2.bf16.msra.mxu0 0
      %568 = vmatprep.subr.bf16.mxu0 0
      %569 = vmatpush2.bf16.msra.mxu0 0
      %570 = vmatprep.subr.bf16.mxu0 0
      %571 = vmatpush2.bf16.msra.mxu0 %v540
      %572 = vmatprep.subr.bf16.mxu0 0
      %573 = vmatpush2.bf16.msra.mxu0 %v499
      %574 = vmatprep.mubr.bf16.mxu0 %v512
      %575 = vmatmul.mubr.bf16.gmra.mxu0 %v429
      %v576 = vpop.f32.mrf.mxu0
      %v577 = vadd.f32 0.0, %v576
      %v578 = vpop.f32.mrf.mxu0
      %v579 = vpop.f32.mrf.mxu0
      %v580 = vadd.f32 0.0, %v579
      %v581 = vpop.f32.mrf.mxu0
      %582 = vmatprep.mubr.bf16.mxu0 %v515
      %583 = vmatmul.mubr.bf16.gmra.mxu0 %v431
      %v584 = vpop.f32.mrf.mxu0
      %v585 = vadd.f32 0.0, %v584
      %v586 = vpop.f32.mrf.mxu0
      %v587 = vpop.f32.mrf.mxu0
      %v588 = vadd.f32 0.0, %v587
      %v589 = vpop.f32.mrf.mxu0
      %590 = vmatprep.mubr.bf16.mxu0 %v518
      %591 = vmatmul.mubr.bf16.gmra.mxu0 %v433
      %v592 = vpop.f32.mrf.mxu0
      %v593 = vadd.f32 0.0, %v592
      %v594 = vpop.f32.mrf.mxu0
      %v595 = vpop.f32.mrf.mxu0
      %v596 = vadd.f32 0.0, %v595
      %v597 = vpop.f32.mrf.mxu0
      %598 = vmatprep.mubr.bf16.mxu0 %v521
      %599 = vmatmul.mubr.bf16.gmra.mxu0 %v435
      %v600 = vpop.f32.mrf.mxu0
      %v601 = vadd.f32 0.0, %v600
      %v602 = vpop.f32.mrf.mxu0
      %v603 = vpop.f32.mrf.mxu0
      %v604 = vadd.f32 0.0, %v603
      %v605 = vpop.f32.mrf.mxu0
      %606 = vmatprep.mubr.bf16.mxu0 %v524
      %607 = vmatmul.mubr.bf16.gmra.mxu0 %v437
      %v608 = vpop.f32.mrf.mxu0
      %v609 = vadd.f32 0.0, %v608
      %v610 = vpop.f32.mrf.mxu0
      %v611 = vpop.f32.mrf.mxu0
      %v612 = vadd.f32 0.0, %v611
      %v613 = vpop.f32.mrf.mxu0
      %614 = vmatprep.mubr.bf16.mxu0 %v527
      %615 = vmatmul.mubr.bf16.gmra.mxu0 %v439
      %v616 = vpop.f32.mrf.mxu0
      %v617 = vadd.f32 0.0, %v616
      %v618 = vpop.f32.mrf.mxu0
      %v619 = vpop.f32.mrf.mxu0
      %v620 = vadd.f32 0.0, %v619
      %v621 = vpop.f32.mrf.mxu0
      %622 = vmatprep.mubr.bf16.mxu0 %v530
      %623 = vmatmul.mubr.bf16.gmra.mxu0 %v441
      %v624 = vpop.f32.mrf.mxu0
      %v625 = vadd.f32 0.0, %v624
      %v626 = vpop.f32.mrf.mxu0
      %v627 = vpop.f32.mrf.mxu0
      %v628 = vadd.f32 0.0, %v627
      %v629 = vpop.f32.mrf.mxu0
      %630 = vmatprep.mubr.bf16.mxu0 %v533
      %631 = vmatmul.mubr.bf16.gmra.mxu0 %v443
      %v632 = vpop.f32.mrf.mxu0
      %v633 = vadd.f32 0.0, %v632
      %v634 = vpop.f32.mrf.mxu0
      %v635 = vpop.f32.mrf.mxu0
      %v636 = vadd.f32 0.0, %v635
      %v637 = vpop.f32.mrf.mxu0
      %638 = vdwg.mxu0
      %v639 = vadd.f32 %v330, %v577
      %v640 = vadd.f32 %v331, %v580
      %v641 = vadd.f32 %v332, %v585
      %v642 = vadd.f32 %v333, %v588
      %v643 = vadd.f32 %v334, %v593
      %v644 = vadd.f32 %v335, %v596
      %v645 = vadd.f32 %v336, %v601
      %v646 = vadd.f32 %v337, %v604
      %v647 = vadd.f32 %v338, %v609
      %v648 = vadd.f32 %v339, %v612
      %v649 = vadd.f32 %v340, %v617
      %v650 = vadd.f32 %v341, %v620
      %v651 = vadd.f32 %v342, %v625
      %v652 = vadd.f32 %v343, %v628
      %v653 = vadd.f32 %v344, %v633
      %v654 = vadd.f32 %v345, %v636
      %vm655 = vcmask 523264
      %656 = vst.msk [vmem:[#allocation2] sm:$0xff] %vm655, %v639
      %657 = vst.msk [vmem:[#allocation2 + $0x8] sm:$0xff] %vm655, %v640
      %658 = vst.msk [vmem:[#allocation2 + $0x10] sm:$0xff] %vm655, %v641
      %659 = vst.msk [vmem:[#allocation2 + $0x18] sm:$0xff] %vm655, %v642
      %660 = vst.msk [vmem:[#allocation2 + $0x20] sm:$0xff] %vm655, %v643
      %661 = vst.msk [vmem:[#allocation2 + $0x28] sm:$0xff] %vm655, %v644
      %662 = vst.msk [vmem:[#allocation2 + $0x30] sm:$0xff] %vm655, %v645
      %663 = vst.msk [vmem:[#allocation2 + $0x38] sm:$0xff] %vm655, %v646
      %664 = vst.msk [vmem:[#allocation2 + $0x40] sm:$0xff] %vm655, %v647
      %665 = vst.msk [vmem:[#allocation2 + $0x48] sm:$0xff] %vm655, %v648
      %666 = vst.msk [vmem:[#allocation2 + $0x50] sm:$0xff] %vm655, %v649
      %667 = vst.msk [vmem:[#allocation2 + $0x58] sm:$0xff] %vm655, %v650
      %668 = vst.msk [vmem:[#allocation2 + $0x60] sm:$0xff] %vm655, %v651
      %669 = vst.msk [vmem:[#allocation2 + $0x68] sm:$0xff] %vm655, %v652
      %670 = vst.msk [vmem:[#allocation2 + $0x70] sm:$0xff] %vm655, %v653
      %671 = vst.msk [vmem:[#allocation2 + $0x78] sm:$0xff] %vm655, %v654
      // Predicated region
      $region41: #{tpu_custom_call.1} parent=35 // pred_check
        %p672 = pneg %p309
      $region42: #{tpu_custom_call.1} parent=35 // pred_check_branch
        %674 = sbr.rel (%p672) target = $region44
      $region43: #{tpu_custom_call.1} parent=35 // pred_region
        %v675 = vld [vmem:[#allocation2] sm:$0xff]
        %v676 = vld [vmem:[#allocation2 + $0x8] sm:$0xff]
        %v677 = vld [vmem:[#allocation2 + $0x10] sm:$0xff]
        %v678 = vld [vmem:[#allocation2 + $0x18] sm:$0xff]
        %v679 = vld [vmem:[#allocation2 + $0x20] sm:$0xff]
        %v680 = vld [vmem:[#allocation2 + $0x28] sm:$0xff]
        %v681 = vld [vmem:[#allocation2 + $0x30] sm:$0xff]
        %v682 = vld [vmem:[#allocation2 + $0x38] sm:$0xff]
        %v683 = vld [vmem:[#allocation2 + $0x40] sm:$0xff]
        %v684 = vld [vmem:[#allocation2 + $0x48] sm:$0xff]
        %v685 = vld [vmem:[#allocation2 + $0x50] sm:$0xff]
        %v686 = vld [vmem:[#allocation2 + $0x58] sm:$0xff]
        %v687 = vld [vmem:[#allocation2 + $0x60] sm:$0xff]
        %v688 = vld [vmem:[#allocation2 + $0x68] sm:$0xff]
        %v689 = vld [vmem:[#allocation2 + $0x70] sm:$0xff]
        %v690 = vld [vmem:[#allocation2 + $0x78] sm:$0xff]
        %v691 = vld [vmem:[%s295] sm:$0x1]
        %v693 = vlaneseq
        %v694 = vshrl.u32 %v693, 7
        %v695 = vsub.s32 0, %v694
        %v696 = vrot.slane %v691, %v695
        %v698 = vmul.f32 %v675, %v696
        %v699 = vmul.f32 %v676, %v696
        %v700 = vmul.f32 %v677, %v696
        %v701 = vmul.f32 %v678, %v696
        %v702 = vmul.f32 %v679, %v696
        %v703 = vmul.f32 %v680, %v696
        %v704 = vmul.f32 %v681, %v696
        %v705 = vmul.f32 %v682, %v696
        %v706 = vmul.f32 %v683, %v696
        %v707 = vmul.f32 %v684, %v696
        %v708 = vmul.f32 %v685, %v696
        %v709 = vmul.f32 %v686, %v696
        %v710 = vmul.f32 %v687, %v696
        %v711 = vmul.f32 %v688, %v696
        %v712 = vmul.f32 %v689, %v696
        %v713 = vmul.f32 %v690, %v696
        %v714 = vld [vmem:[%s298] sm:$0x1]
        %v716 = vlaneseq
        %v717 = vshrl.u32 %v716, 7
        %v718 = vsub.s32 0, %v717
        %v719 = vrot.slane %v714, %v718
        %v721 = vadd.f32 %v698, %v719
        %v722 = vadd.f32 %v699, %v719
        %v723 = vadd.f32 %v700, %v719
        %v724 = vadd.f32 %v701, %v719
        %v725 = vadd.f32 %v702, %v719
        %v726 = vadd.f32 %v703, %v719
        %v727 = vadd.f32 %v704, %v719
        %v728 = vadd.f32 %v705, %v719
        %v729 = vadd.f32 %v706, %v719
        %v730 = vadd.f32 %v707, %v719
        %v731 = vadd.f32 %v708, %v719
        %v732 = vadd.f32 %v709, %v719
        %v733 = vadd.f32 %v710, %v719
        %v734 = vadd.f32 %v711, %v719
        %v735 = vadd.f32 %v712, %v719
        %v736 = vadd.f32 %v713, %v719
        %v737 = vmax.f32 %v721, 0.0
        %v738 = vmax.f32 %v722, 0.0
        %v739 = vmax.f32 %v723, 0.0
        %v740 = vmax.f32 %v724, 0.0
        %v741 = vmax.f32 %v725, 0.0
        %v742 = vmax.f32 %v726, 0.0
        %v743 = vmax.f32 %v727, 0.0
        %v744 = vmax.f32 %v728, 0.0
        %v745 = vmax.f32 %v729, 0.0
        %v746 = vmax.f32 %v730, 0.0
        %v747 = vmax.f32 %v731, 0.0
        %v748 = vmax.f32 %v732, 0.0
        %v749 = vmax.f32 %v733, 0.0
        %v750 = vmax.f32 %v734, 0.0
        %v751 = vmax.f32 %v735, 0.0
        %v752 = vmax.f32 %v736, 0.0
        %v753 = vpack.c.bf16 %v738, %v737
        %v754 = vpack.c.bf16 %v740, %v739
        %v755 = vpack.c.bf16 %v742, %v741
        %v756 = vpack.c.bf16 %v744, %v743
        %v757 = vpack.c.bf16 %v746, %v745
        %v758 = vpack.c.bf16 %v748, %v747
        %v759 = vpack.c.bf16 %v750, %v749
        %v760 = vpack.c.bf16 %v752, %v751
        %v769 = vunpack.c.l.b16 %v753
        %v770 = vunpack.c.h.b16 %v753
        %v771 = vunpack.c.l.b16 %v754
        %v772 = vunpack.c.h.b16 %v754
        %v773 = vunpack.c.l.b16 %v755
        %v774 = vunpack.c.h.b16 %v755
        %v775 = vunpack.c.l.b16 %v756
        %v776 = vunpack.c.h.b16 %v756
        %v777 = vunpack.c.l.b16 %v757
        %v778 = vunpack.c.h.b16 %v757
        %v779 = vunpack.c.l.b16 %v758
        %v780 = vunpack.c.h.b16 %v758
        %v781 = vunpack.c.l.b16 %v759
        %v782 = vunpack.c.h.b16 %v759
        %v783 = vunpack.c.l.b16 %v760
        %v784 = vunpack.c.h.b16 %v760
        %v785 = vpack.c.b16 %v769, %v769
        %v786 = vpack.c.b16 %v770, %v770
        %v787 = vpack.c.b16 %v771, %v771
        %v788 = vpack.c.b16 %v772, %v772
        %v789 = vpack.c.b16 %v773, %v773
        %v790 = vpack.c.b16 %v774, %v774
        %v791 = vpack.c.b16 %v775, %v775
        %v792 = vpack.c.b16 %v776, %v776
        %v793 = vpack.c.b16 %v777, %v777
        %v794 = vpack.c.b16 %v778, %v778
        %v795 = vpack.c.b16 %v779, %v779
        %v796 = vpack.c.b16 %v780, %v780
        %v797 = vpack.c.b16 %v781, %v781
        %v798 = vpack.c.b16 %v782, %v782
        %v799 = vpack.c.b16 %v783, %v783
        %v800 = vpack.c.b16 %v784, %v784
        %vm817 = vcmask 519168
        %818 = vst.msk [vmem:[%s306] sm:$0xf] %vm817, %v785
        %819 = vst.msk [vmem:[%s306 + $0x4] sm:$0xf] %vm817, %v786
        %820 = vst.msk [vmem:[%s306 + $0x8] sm:$0xf] %vm817, %v787
        %821 = vst.msk [vmem:[%s306 + $0xc] sm:$0xf] %vm817, %v788
        %822 = vst.msk [vmem:[%s306 + $0x10] sm:$0xf] %vm817, %v789
        %823 = vst.msk [vmem:[%s306 + $0x14] sm:$0xf] %vm817, %v790
        %824 = vst.msk [vmem:[%s306 + $0x18] sm:$0xf] %vm817, %v791
        %825 = vst.msk [vmem:[%s306 + $0x1c] sm:$0xf] %vm817, %v792
        %826 = vst.msk [vmem:[%s306 + $0x20] sm:$0xf] %vm817, %v793
        %827 = vst.msk [vmem:[%s306 + $0x24] sm:$0xf] %vm817, %v794
        %828 = vst.msk [vmem:[%s306 + $0x28] sm:$0xf] %vm817, %v795
        %829 = vst.msk [vmem:[%s306 + $0x2c] sm:$0xf] %vm817, %v796
        %830 = vst.msk [vmem:[%s306 + $0x30] sm:$0xf] %vm817, %v797
        %831 = vst.msk [vmem:[%s306 + $0x34] sm:$0xf] %vm817, %v798
        %832 = vst.msk [vmem:[%s306 + $0x38] sm:$0xf] %vm817, %v799
        %833 = vst.msk [vmem:[%s306 + $0x3c] sm:$0xf] %vm817, %v800
      $region44: #{tpu_custom_call.1} parent=35 // pred_fallthru
        _
      %s834 = smul.u32 16, %s20
      %p835 = scmp.lt.s32.totalorder %s834, 255
      %s836 = scalar_select %p835, %s834, 255
      %p837 = scmp.lt.s32.totalorder %s21, 0
      %s838 = scalar_select %p837, %s21, 0
      %s839 = sadd.s32 %s838, %s836
      %s840 = smul.addr %s839, 4
      %s841 = scalar_lea.vmem %s4, %s840
      // Predicated region
      $region45: #{tpu_custom_call.1} parent=35 // pred_check
        %p842 = pneg %p162
      $region46: #{tpu_custom_call.1} parent=35 // pred_check_branch
        %844 = sbr.rel (%p842) target = $region48
      $region47: #{tpu_custom_call.1} parent=35 // pred_region
        %s845 = smul.u32 16, %s20
      $region48: #{tpu_custom_call.1} parent=35 // pred_fallthru
        _
    $region36: #{tpu_custom_call.1} parent=5 // pred_fallthru
      _
    %p846 = scmp.le.s32.totalorder 2, %s10
    // Predicated region
    $region49: #{tpu_custom_call.1} parent=5 // pred_check
      %p847 = pneg %p846
    $region50: #{tpu_custom_call.1} parent=5 // pred_check_branch
      %849 = sbr.rel (%p847) target = $region52
    $region51: #{tpu_custom_call.1} parent=5 // pred_region
      %s850 = ssub.s32 %s10, 2
      // Predicated region
      $region53: #{tpu_custom_call.1} parent=51 // pred_check
        %p851 = pneg %p168
      $region54: #{tpu_custom_call.1} parent=51 // pred_check_branch
        %853 = sbr.rel (%p851) target = $region56
      $region55: #{tpu_custom_call.1} parent=51 // pred_region
        %s854 = smul.u32 16, %s23
        %p855 = scmp.lt.s32.totalorder %s854, 255
        %s856 = scalar_select %p855, %s854, 255
        %p857 = scmp.lt.s32.totalorder %s24, 0
        %s858 = scalar_select %p857, %s24, 0
        %s859 = sadd.s32 %s858, %s856
        %s860 = smul.addr %s859, 4
        %s861 = scalar_lea.vmem %s4, %s860
      $region56: #{tpu_custom_call.1} parent=51 // pred_fallthru
        _
    $region52: #{tpu_custom_call.1} parent=5 // pred_fallthru
      _
  $region6: #{tpu_custom_call.1} parent=0 // loop_footer
    %s14 = sadd.s32 1, %s10
  $region7: #{tpu_custom_call.1} parent=0 // loop_footer_branch
    %9 = sbr.rel target = $region3
  $region8: #{tpu_custom_call.1} parent=0 // loop_exit
    _

</llo_original>
